<compile_context>
chip_gen: v6e
topology: v6e:2x2x1
jax: 0.10.0
libtpu: 0.0.40
codegen_flags: <defaults>
</compile_context>

<pallas_src>
import functools

import jax
import jax.numpy as jnp
from jax.experimental import pallas as pl
from jax.experimental.pallas import tpu as pltpu


# ----------------------------- Pallas kernel ---------------------------------

def _kv3x3_kernel(a_ref, b1_ref, b2_ref, w_ref, bias_ref, o_ref, *,
                  TH, W, Cin, nct):
    """Fused Key+Value 3x3 conv for one (batch, row-tile, Cout-tile) grid step.

    a_ref   : (1, TH, W+2, Cin)  bf16  body rows [rt*TH, rt*TH+TH) of padded x
    b1_ref  : (1, 1,  W+2, Cin)  bf16  bottom halo row rt*TH+TH
    b2_ref  : (1, 1,  W+2, Cin)  bf16  bottom halo row rt*TH+TH+1
    w_ref   : (9*Cin, cpad)      bf16  fused Key|Value weights (VMEM resident)
    bias_ref: (1, cpad)          f32   fused Key|Value bias    (VMEM resident)
    o_ref   : (1, TH*W, 128)     f32   lane-dense output tile
    """
    # Assemble the (TH+2, W+2, Cin) halo window for this row tile.
    win = jnp.concatenate([a_ref[0], b1_ref[0], b2_ref[0]], axis=0)

    # Select this step's 128-wide Cout tile from the resident fused slab.
    if nct == 1:
        w = w_ref[...]                                    # (9*Cin, 128)
        b = bias_ref[...]                                 # (1, 128)
    else:
        off = pl.multiple_of(pl.program_id(2) * 128, 128)
        w = w_ref[:, pl.ds(off, 128)]
        b = bias_ref[:, pl.ds(off, 128)]

    def tap(dy, dx):  # shifted im2col view of the window
        return win[dy:dy + TH, dx:dx + W, :].reshape(TH * W, Cin)

    if Cin < 32:
        # Tiny Cin: fuse the 9 taps into a single big-K MXU matmul.
        patch = jnp.concatenate(
            [tap(dy, dx) for dy in range(3) for dx in range(3)], axis=1)
        acc = jnp.dot(patch, w, preferred_element_type=jnp.float32)
    else:
        # Large Cin: per-tap accumulation — no (TH*W, 9*Cin) patch buffer.
        acc = jnp.zeros((TH * W, 128), jnp.float32)
        t = 0
        for dy in range(3):
            for dx in range(3):
                acc = acc + jnp.dot(tap(dy, dx), w[t * Cin:(t + 1) * Cin, :],
                                    preferred_element_type=jnp.float32)
                t += 1

    o_ref[0] = (acc + b).astype(o_ref.dtype)


# ------------------------------ host wrapper ----------------------------------

def _oihw_to_mat(w_oihw):
    """(Cout, Cin, 3, 3) -> (9*Cin, Cout), row order = (kh, kw, cin)."""
    cout, cin = w_oihw.shape[0], w_oihw.shape[1]
    return jnp.transpose(w_oihw, (2, 3, 1, 0)).reshape(9 * cin, cout)


def _pick_row_tile(H, W, max_rows=16):
    """Largest TH <= max_rows dividing H with sublane-aligned TH*W, preferring
    at least 2 row tiles; falls back to the full height (exempt full-dim block)."""
    for th in range(min(H // 2, max_rows), 0, -1):
        if H % th == 0 and (th * W) % 8 == 0:
            return th
    return H


@jax.jit
def keyvalue_pallas(x_nchw, w_key, b_key, w_val, b_val):
    """Returns (Key(x), Value(x)) in NCHW, matching the PyTorch module."""
    N, Cin, H, W = x_nchw.shape
    keydim, valdim = w_key.shape[0], w_val.shape[0]
    ctot = keydim + valdim
    cpad = ((ctot + 127) // 128) * 128        # lane-dense fused Cout
    nct = cpad // 128
    TH = _pick_row_tile(H, W)
    nrt = H // TH

    # ---- wrapper glue over x: bf16 cast + NCHW->NHWC + zero pad (one pass) ----
    xb = jnp.transpose(x_nchw.astype(jnp.bfloat16), (0, 2, 3, 1))
    xpad = jnp.pad(xb, ((0, 0), (1, 1), (1, 1), (0, 0)))   # (N, H+2, W+2, Cin)

    # Fused Key|Value weights/bias, zero-padded to the lane-dense Cout.
    wmat = jnp.concatenate([_oihw_to_mat(w_key), _oihw_to_mat(w_val)], axis=1)
    bvec = jnp.concatenate([b_key, b_val])
    if cpad != ctot:
        wmat = jnp.pad(wmat, ((0, 0), (0, cpad - ctot)))
        bvec = jnp.pad(bvec, (0, cpad - ctot))
    wmat = wmat.astype(jnp.bfloat16)                        # (9*Cin, cpad)
    bvec = bvec.reshape(1, cpad).astype(jnp.float32)        # (1, cpad)

    kernel = functools.partial(_kv3x3_kernel, TH=TH, W=W, Cin=Cin, nct=nct)
    out = pl.pallas_call(
        kernel,
        out_shape=jax.ShapeDtypeStruct((N, H * W, cpad), jnp.float32),
        grid=(N, nrt, nct),
        in_specs=[
            # Body rows of the padded activation for this row tile.
            pl.BlockSpec((1, TH, W + 2, Cin), lambda n, r, c: (n, r, 0, 0)),
            # Two bottom halo rows (size-1 row blocks of the same padded x).
            pl.BlockSpec((1, 1, W + 2, Cin),
                         lambda n, r, c: (n, (r + 1) * TH, 0, 0)),
            pl.BlockSpec((1, 1, W + 2, Cin),
                         lambda n, r, c: (n, (r + 1) * TH + 1, 0, 0)),
            # Fused weight / bias slabs: constant block index -> DMA'd once,
            # VMEM-resident across the whole grid (no per-step re-fetch).
            pl.BlockSpec((9 * Cin, cpad), lambda n, r, c: (0, 0)),
            pl.BlockSpec((1, cpad), lambda n, r, c: (0, 0)),
        ],
        out_specs=pl.BlockSpec((1, TH * W, 128), lambda n, r, c: (n, r, c)),
        compiler_params=pltpu.CompilerParams(
            dimension_semantics=("parallel", "parallel", "parallel"),
            vmem_limit_bytes=48 * 1024 * 1024),
    )(xpad, xpad, xpad, wmat, bvec)

    out = out.reshape(N, H, W, cpad)
    # TODO(synk): emit channel-major output from the kernel to drop these transposes.
    key_out = jnp.transpose(out[..., :keydim], (0, 3, 1, 2))
    val_out = jnp.transpose(out[..., keydim:ctot], (0, 3, 1, 2))
    return key_out, val_out


# --------------------------------- module -------------------------------------

def _init_conv(key, cin, cout):
    """Deterministic PyTorch-style uniform init; weight in OIHW layout."""
    kw, kb = jax.random.split(key)
    fan_in = cin * 9
    bound = 1.0 / (fan_in ** 0.5)
    w = jax.random.uniform(kw, (cout, cin, 3, 3), jnp.float32, -bound, bound)
    b = jax.random.uniform(kb, (cout,), jnp.float32, -bound, bound)
    return w, b


class KeyValuePallas:
    def __init__(self, indim, keydim, valdim, *, key):
        k1, k2 = jax.random.split(key)
        self.wk, self.bk = _init_conv(k1, indim, keydim)
        self.wv, self.bv = _init_conv(k2, indim, valdim)

    def __call__(self, x_nchw):
        return keyvalue_pallas(x_nchw, self.wk, self.bk, self.wv, self.bv)

    # pure-JAX fp32 reference for correctness checking
    def reference(self, x_nchw):
        def conv(x, w, b):
            y = jax.lax.conv_general_dilated(
                x, w, window_strides=(1, 1), padding=((1, 1), (1, 1)),
                dimension_numbers=("NCHW", "OIHW", "NCHW"),
                precision=jax.lax.Precision.HIGHEST)
            return y + b[None, :, None, None]
        return conv(x_nchw, self.wk, self.bk), conv(x_nchw, self.wv, self.bv)


# ---------------------------------- demo ---------------------------------------

if __name__ == "__main__":
    key = jax.random.PRNGKey(0)
    k_x, k_p = jax.random.split(key)

    N, C, H, W = 2, 8, 16, 16
    KEYDIM, VALDIM = 64, 32                 # fused Cout = 96 -> padded to 128 lanes
    x = jax.random.normal(k_x, (N, C, H, W), jnp.float32)

    mod = KeyValuePallas(C, KEYDIM, VALDIM, key=k_p)
    k_out, v_out = mod(x)
    jax.block_until_ready((k_out, v_out))

    k_ref, v_ref = mod.reference(x)
    assert k_out.shape == (N, KEYDIM, H, W), k_out.shape
    assert v_out.shape == (N, VALDIM, H, W), v_out.shape
    # bf16 operands with f32 accumulation vs fp32 HIGHEST reference -> relaxed tol.
    assert jnp.allclose(k_out, k_ref, atol=5e-2, rtol=5e-2), \
        float(jnp.max(jnp.abs(k_out - k_ref)))
    assert jnp.allclose(v_out, v_ref, atol=5e-2, rtol=5e-2), \
        float(jnp.max(jnp.abs(v_out - v_ref)))

    print("KERNEL_OK")
</pallas_src>

<mosaic_0001>
module attributes {stable_mosaic.version = 11 : i64} {
  func.func @_kv3x3_kernel(%arg0: i32, %arg1: i32, %arg2: i32, %arg3: memref<1x8x18x8xbf16, #tpu.memory_space<vmem>>, %arg4: memref<1x1x18x8xbf16, #tpu.memory_space<vmem>>, %arg5: memref<1x1x18x8xbf16, #tpu.memory_space<vmem>>, %arg6: memref<72x128xbf16, #tpu.memory_space<vmem>>, %arg7: memref<1x128xf32, #tpu.memory_space<vmem>>, %arg8: memref<1x128x128xf32, #tpu.memory_space<vmem>>) attributes {dimension_semantics = [#tpu.dimension_semantics<parallel>, #tpu.dimension_semantics<parallel>, #tpu.dimension_semantics<parallel>], iteration_bounds = array<i64: 2, 2, 1>, scalar_prefetch = 0 : i64, scratch_operands = 0 : i64, tpu.core_type = #tpu.core_type<tc>, window_params = [{transform_indices = @transform_0, window_bounds = array<i64: 1, 8, 18, 8>}, {transform_indices = @transform_1, window_bounds = array<i64: 1, 1, 18, 8>}, {transform_indices = @transform_2, window_bounds = array<i64: 1, 1, 18, 8>}, {pipeline_mode = #tpu.pipeline_mode<synchronous>, transform_indices = @transform_3, window_bounds = array<i64: 72, 128>}, {pipeline_mode = #tpu.pipeline_mode<synchronous>, transform_indices = @transform_4, window_bounds = array<i64: 1, 128>}, {transform_indices = @transform_5, window_bounds = array<i64: 1, 128, 128>}]} {
    %c0 = arith.constant 0 : index
    %c0_0 = arith.constant 0 : index
    %c0_1 = arith.constant 0 : index
    %c0_2 = arith.constant 0 : index
    %0 = vector.load %arg3[%c0, %c0_0, %c0_1, %c0_2] : memref<1x8x18x8xbf16, #tpu.memory_space<vmem>>, vector<1x8x18x8xbf16>
    %1 = vector.shape_cast %0 : vector<1x8x18x8xbf16> to vector<8x18x8xbf16>
    %c0_3 = arith.constant 0 : index
    %c0_4 = arith.constant 0 : index
    %c0_5 = arith.constant 0 : index
    %c0_6 = arith.constant 0 : index
    %2 = vector.load %arg4[%c0_3, %c0_4, %c0_5, %c0_6] : memref<1x1x18x8xbf16, #tpu.memory_space<vmem>>, vector<1x1x18x8xbf16>
    %3 = vector.shape_cast %2 : vector<1x1x18x8xbf16> to vector<1x18x8xbf16>
    %c0_7 = arith.constant 0 : index
    %c0_8 = arith.constant 0 : index
    %c0_9 = arith.constant 0 : index
    %c0_10 = arith.constant 0 : index
    %4 = vector.load %arg5[%c0_7, %c0_8, %c0_9, %c0_10] : memref<1x1x18x8xbf16, #tpu.memory_space<vmem>>, vector<1x1x18x8xbf16>
    %5 = vector.shape_cast %4 : vector<1x1x18x8xbf16> to vector<1x18x8xbf16>
    %6 = tpu.concatenate %1, %3, %5 in 0 : vector<8x18x8xbf16>, vector<1x18x8xbf16>, vector<1x18x8xbf16> -> vector<10x18x8xbf16>
    %c0_11 = arith.constant 0 : index
    %c0_12 = arith.constant 0 : index
    %7 = vector.load %arg6[%c0_11, %c0_12] : memref<72x128xbf16, #tpu.memory_space<vmem>>, vector<72x128xbf16>
    %c0_13 = arith.constant 0 : index
    %c0_14 = arith.constant 0 : index
    %8 = vector.load %arg7[%c0_13, %c0_14] : memref<1x128xf32, #tpu.memory_space<vmem>>, vector<1x128xf32>
    %9 = vector.extract_strided_slice %6 {offsets = [0, 0, 0], sizes = [8, 16, 8], strides = [1, 1, 1]} : vector<10x18x8xbf16> to vector<8x16x8xbf16>
    %10 = vector.shape_cast %9 : vector<8x16x8xbf16> to vector<128x8xbf16>
    %11 = vector.extract_strided_slice %6 {offsets = [0, 1, 0], sizes = [8, 16, 8], strides = [1, 1, 1]} : vector<10x18x8xbf16> to vector<8x16x8xbf16>
    %12 = vector.shape_cast %11 : vector<8x16x8xbf16> to vector<128x8xbf16>
    %13 = vector.extract_strided_slice %6 {offsets = [0, 2, 0], sizes = [8, 16, 8], strides = [1, 1, 1]} : vector<10x18x8xbf16> to vector<8x16x8xbf16>
    %14 = vector.shape_cast %13 : vector<8x16x8xbf16> to vector<128x8xbf16>
    %15 = vector.extract_strided_slice %6 {offsets = [1, 0, 0], sizes = [8, 16, 8], strides = [1, 1, 1]} : vector<10x18x8xbf16> to vector<8x16x8xbf16>
    %16 = vector.shape_cast %15 : vector<8x16x8xbf16> to vector<128x8xbf16>
    %17 = vector.extract_strided_slice %6 {offsets = [1, 1, 0], sizes = [8, 16, 8], strides = [1, 1, 1]} : vector<10x18x8xbf16> to vector<8x16x8xbf16>
    %18 = vector.shape_cast %17 : vector<8x16x8xbf16> to vector<128x8xbf16>
    %19 = vector.extract_strided_slice %6 {offsets = [1, 2, 0], sizes = [8, 16, 8], strides = [1, 1, 1]} : vector<10x18x8xbf16> to vector<8x16x8xbf16>
    %20 = vector.shape_cast %19 : vector<8x16x8xbf16> to vector<128x8xbf16>
    %21 = vector.extract_strided_slice %6 {offsets = [2, 0, 0], sizes = [8, 16, 8], strides = [1, 1, 1]} : vector<10x18x8xbf16> to vector<8x16x8xbf16>
    %22 = vector.shape_cast %21 : vector<8x16x8xbf16> to vector<128x8xbf16>
    %23 = vector.extract_strided_slice %6 {offsets = [2, 1, 0], sizes = [8, 16, 8], strides = [1, 1, 1]} : vector<10x18x8xbf16> to vector<8x16x8xbf16>
    %24 = vector.shape_cast %23 : vector<8x16x8xbf16> to vector<128x8xbf16>
    %25 = vector.extract_strided_slice %6 {offsets = [2, 2, 0], sizes = [8, 16, 8], strides = [1, 1, 1]} : vector<10x18x8xbf16> to vector<8x16x8xbf16>
    %26 = vector.shape_cast %25 : vector<8x16x8xbf16> to vector<128x8xbf16>
    %27 = tpu.concatenate %10, %12, %14, %16, %18, %20, %22, %24, %26 in 1 : vector<128x8xbf16>, vector<128x8xbf16>, vector<128x8xbf16>, vector<128x8xbf16>, vector<128x8xbf16>, vector<128x8xbf16>, vector<128x8xbf16>, vector<128x8xbf16>, vector<128x8xbf16> -> vector<128x72xbf16>
    %cst = arith.constant dense<0.000000e+00> : vector<128x128xf32>
    %28 = tpu.matmul %27, %7, %cst {dimension_numbers = #tpu.dot_dimension_numbers<[1], [0], [0], [1], [0, 0, 1, 1], [], []>} : vector<128x72xbf16>, vector<72x128xbf16>, vector<128x128xf32> -> vector<128x128xf32>
    %29 = vector.broadcast %8 : vector<1x128xf32> to vector<128x128xf32>
    %30 = arith.addf %28, %29 : vector<128x128xf32>
    %c0_15 = arith.constant 0 : index
    %c0_16 = arith.constant 0 : index
    %c0_17 = arith.constant 0 : index
    %31 = vector.load %arg8[%c0_15, %c0_16, %c0_17] : memref<1x128x128xf32, #tpu.memory_space<vmem>>, vector<1x128x128xf32>
    %32 = vector.shape_cast %31 : vector<1x128x128xf32> to vector<128x128xf32>
    %33 = vector.shape_cast %30 : vector<128x128xf32> to vector<1x128x128xf32>
    tpu.vector_store %arg8[%c0_15, %c0_16, %c0_17], %33 {strides = array<i32>} : memref<1x128x128xf32, #tpu.memory_space<vmem>>, vector<1x128x128xf32>,
    return
  }
  func.func @transform_0(%arg0: i32, %arg1: i32, %arg2: i32) -> (i32, i32, i32, i32) {
    %c0_i32 = arith.constant 0 : i32
    %c0_i32_0 = arith.constant 0 : i32
    %c0_i32_1 = arith.constant 0 : i32
    return %arg0, %arg1, %c0_i32, %c0_i32_0 : i32, i32, i32, i32
  }
  func.func @transform_1(%arg0: i32, %arg1: i32, %arg2: i32) -> (i32, i32, i32, i32) {
    %c1_i32 = arith.constant 1 : i32
    %0 = arith.addi %arg1, %c1_i32 : i32
    %c8_i32 = arith.constant 8 : i32
    %1 = arith.muli %0, %c8_i32 : i32
    %c0_i32 = arith.constant 0 : i32
    %c0_i32_0 = arith.constant 0 : i32
    %c0_i32_1 = arith.constant 0 : i32
    return %arg0, %1, %c0_i32, %c0_i32_0 : i32, i32, i32, i32
  }
  func.func @transform_2(%arg0: i32, %arg1: i32, %arg2: i32) -> (i32, i32, i32, i32) {
    %c1_i32 = arith.constant 1 : i32
    %0 = arith.addi %arg1, %c1_i32 : i32
    %c8_i32 = arith.constant 8 : i32
    %1 = arith.muli %0, %c8_i32 : i32
    %c1_i32_0 = arith.constant 1 : i32
    %2 = arith.addi %1, %c1_i32_0 : i32
    %c0_i32 = arith.constant 0 : i32
    %c0_i32_1 = arith.constant 0 : i32
    %c0_i32_2 = arith.constant 0 : i32
    return %arg0, %2, %c0_i32, %c0_i32_1 : i32, i32, i32, i32
  }
  func.func @transform_3(%arg0: i32, %arg1: i32, %arg2: i32) -> (i32, i32) {
    %c0_i32 = arith.constant 0 : i32
    %c0_i32_0 = arith.constant 0 : i32
    %c0_i32_1 = arith.constant 0 : i32
    return %c0_i32, %c0_i32_0 : i32, i32
  }
  func.func @transform_4(%arg0: i32, %arg1: i32, %arg2: i32) -> (i32, i32) {
    %c0_i32 = arith.constant 0 : i32
    %c0_i32_0 = arith.constant 0 : i32
    %c0_i32_1 = arith.constant 0 : i32
    return %c0_i32, %c0_i32_0 : i32, i32
  }
  func.func @transform_5(%arg0: i32, %arg1: i32, %arg2: i32) -> (i32, i32, i32) {
    %c0_i32 = arith.constant 0 : i32
    return %arg0, %arg1, %arg2 : i32, i32, i32
  }
}

</mosaic_0001>

<llo_original>
// kernel: keyvalue_pallas.1
$region0: #{keyvalue_pallas.1}
  #allocation0 [shape = 'u32[]', space=smem, size = 0x4, offset = 0x4, fixed_abs, tag = 'smem constant byte address 0x4 - core index']
  #allocation1 [shape = 'u32[144,128]{1,0:T(1,128)}', space=vmem, size = 0x12000, scoped, tag = 'internal scratch']
  %s0 = inlined_call_operand.vmem [shape: bf16[2,18,18,8], index: 0, kind: input, shape index: {}, may-alias: {0,1,2}]
  %s1 = inlined_call_operand.vmem [shape: bf16[2,18,18,8], index: 1, kind: input, shape index: {}, may-alias: {0,1,2}]
  %s2 = inlined_call_operand.vmem [shape: bf16[2,18,18,8], index: 2, kind: input, shape index: {}, may-alias: {0,1,2}]
  %s3 = inlined_call_operand.vmem [shape: bf16[72,128], index: 3, kind: input, shape index: {}]
  %s4 = inlined_call_operand.vmem [shape: f32[1,128], index: 4, kind: input, shape index: {}]
  %s5 = inlined_call_operand.vmem [shape: f32[2,256,128], index: 5, kind: output, shape index: {}]
  %s6 = sld [smem:[#allocation0]]
  $region53: #{keyvalue_pallas.1} parent=0
    _
  %s8 = ssub.s32 1, %s6
  %s9 = scalar_select 0, %s8, %s6
  loop: start=0, step=1, limit=6
  $region2: #{keyvalue_pallas.1} parent=0 // loop_pre_header
    _
  $region3: #{keyvalue_pallas.1} parent=0 // loop_header
    %s11 = sphi 0, %s15
    %p12 = scmp.ge.s32.totalorder %s11, 6
    %s18 = sphi 0, %s37
    %s19 = sphi 0, %s33
    %s20 = sphi 0, %s29
    %s21 = sphi 0, %s18
    %s22 = sphi 0, %s19
    %s23 = sphi 0, %s20
    %s24 = sphi 0, %s21
    %s25 = sphi 0, %s22
    %s26 = sphi 0, %s23
    %s42 = sphi 0, %s44
    %s45 = sphi 0, %s42
    %s46 = sphi 0, %s45
    %s62 = sphi 0, %s46
    %s74 = sphi 0, %s76
    %s77 = sphi 0, %s74
    %s78 = sphi 0, %s77
    %s94 = sphi 0, %s78
    %s108 = sphi 0, %s110
    %s111 = sphi 0, %s108
    %s112 = sphi 0, %s111
    %s128 = sphi 0, %s112
    %s132 = sphi 0, %s132
    %s134 = sphi 0, %s132
    %s135 = sphi 0, %s134
    %s149 = sphi 0, %s135
    %s153 = sphi 0, %s153
    %s155 = sphi 0, %s153
    %s156 = sphi 0, %s155
    %s170 = sphi 0, %s156
    %s180 = sphi 0, %s182
    %s183 = sphi 0, %s180
    %s184 = sphi 0, %s183
    %s200 = sphi 0, %s184
  $region4: #{keyvalue_pallas.1} parent=0 // loop_header_branch
    %14 = sbr.rel (%p12) target = $region8
  $region5: #{keyvalue_pallas.1} parent=0 // loop_body
    %s16 = ssub.s32 %s11, 1
    %s17 = ssub.s32 %s11, 2
    %s27 = sadd.s32 1, %s20
    %p28 = scmp.ge.s32.totalorder %s27, 1
    %s29 = scalar_select %p28, 0, %s27
    %s30 = sadd.s32 1, %s19
    %s31 = scalar_select %p28, %s30, %s19
    %p32 = scmp.ge.s32.totalorder %s31, 2
    %s33 = scalar_select %p32, 0, %s31
    %s34 = sadd.s32 1, %s18
    %s35 = scalar_select %p32, %s34, %s18
    %p36 = scmp.ge.s32.totalorder %s35, 2
    %s37 = scalar_select %p36, 0, %s35
    %s38 = ssub.s32 %s18, %s37
    %s39 = ssub.s32 %s19, %s33
    %s40 = sor.u32 %s38, %s39
    %p41 = scmp.eq.s32.totalorder %s40, 0
    %s43 = sadd.s32 %s42, 1
    %s44 = scalar_select %p41, %s42, %s43
    %p47 = pneg %p41
    %p48 = scmp.eq.s32.totalorder %s11, 3
    %p49 = por %p47, %p48
    %p50 = scmp.ne.s32.totalorder %s42, %s45
    %p51 = scmp.eq.s32.totalorder %s11, 0
    %p52 = por %p50, %p51
    %p53 = scmp.ne.s32.totalorder %s42, %s45
    %p54 = scmp.eq.s32.totalorder %s16, 3
    %p55 = por %p53, %p54
    %p56 = scmp.ne.s32.totalorder %s45, %s46
    %p57 = scmp.eq.s32.totalorder %s16, 0
    %p58 = por %p56, %p57
    %p59 = scmp.ne.s32.totalorder %s45, %s46
    %p60 = scmp.eq.s32.totalorder %s17, 3
    %p61 = por %p59, %p60
    %p63 = scmp.ne.s32.totalorder %s46, %s62
    %p64 = scmp.eq.s32.totalorder %s17, 0
    %p65 = por %p63, %p64
    %s66 = sadd.s32 %s19, 1
    %s67 = smul.u32 %s66, 8
    %s68 = sadd.s32 %s33, 1
    %s69 = smul.u32 %s68, 8
    %s70 = ssub.s32 %s18, %s37
    %s71 = ssub.s32 %s67, %s69
    %s72 = sor.u32 %s70, %s71
    %p73 = scmp.eq.s32.totalorder %s72, 0
    %s75 = sadd.s32 %s74, 1
    %s76 = scalar_select %p73, %s74, %s75
    %p79 = pneg %p73
    %p80 = scmp.eq.s32.totalorder %s11, 3
    %p81 = por %p79, %p80
    %p82 = scmp.ne.s32.totalorder %s74, %s77
    %p83 = scmp.eq.s32.totalorder %s11, 0
    %p84 = por %p82, %p83
    %p85 = scmp.ne.s32.totalorder %s74, %s77
    %p86 = scmp.eq.s32.totalorder %s16, 3
    %p87 = por %p85, %p86
    %p88 = scmp.ne.s32.totalorder %s77, %s78
    %p89 = scmp.eq.s32.totalorder %s16, 0
    %p90 = por %p88, %p89
    %p91 = scmp.ne.s32.totalorder %s77, %s78
    %p92 = scmp.eq.s32.totalorder %s17, 3
    %p93 = por %p91, %p92
    %p95 = scmp.ne.s32.totalorder %s78, %s94
    %p96 = scmp.eq.s32.totalorder %s17, 0
    %p97 = por %p95, %p96
    %s98 = sadd.s32 %s19, 1
    %s99 = smul.u32 %s98, 8
    %s100 = sadd.s32 %s99, 1
    %s101 = sadd.s32 %s33, 1
    %s102 = smul.u32 %s101, 8
    %s103 = sadd.s32 %s102, 1
    %s104 = ssub.s32 %s18, %s37
    %s105 = ssub.s32 %s100, %s103
    %s106 = sor.u32 %s104, %s105
    %p107 = scmp.eq.s32.totalorder %s106, 0
    %s109 = sadd.s32 %s108, 1
    %s110 = scalar_select %p107, %s108, %s109
    %p113 = pneg %p107
    %p114 = scmp.eq.s32.totalorder %s11, 3
    %p115 = por %p113, %p114
    %p116 = scmp.ne.s32.totalorder %s108, %s111
    %p117 = scmp.eq.s32.totalorder %s11, 0
    %p118 = por %p116, %p117
    %p119 = scmp.ne.s32.totalorder %s108, %s111
    %p120 = scmp.eq.s32.totalorder %s16, 3
    %p121 = por %p119, %p120
    %p122 = scmp.ne.s32.totalorder %s111, %s112
    %p123 = scmp.eq.s32.totalorder %s16, 0
    %p124 = por %p122, %p123
    %p125 = scmp.ne.s32.totalorder %s111, %s112
    %p126 = scmp.eq.s32.totalorder %s17, 3
    %p127 = por %p125, %p126
    %p129 = scmp.ne.s32.totalorder %s112, %s128
    %p130 = scmp.eq.s32.totalorder %s17, 0
    %p131 = por %p129, %p130
    %s133 = sadd.s32 %s132, 1
    %p136 = scmp.eq.s32.totalorder %s11, 3
    %p137 = scmp.ne.s32.totalorder %s132, %s134
    %p138 = scmp.eq.s32.totalorder %s11, 0
    %p139 = por %p137, %p138
    %p140 = scmp.ne.s32.totalorder %s132, %s134
    %p141 = scmp.eq.s32.totalorder %s16, 3
    %p142 = por %p140, %p141
    %p143 = scmp.ne.s32.totalorder %s134, %s135
    %p144 = scmp.eq.s32.totalorder %s16, 0
    %p145 = por %p143, %p144
    %p146 = scmp.ne.s32.totalorder %s134, %s135
    %p147 = scmp.eq.s32.totalorder %s17, 3
    %p148 = por %p146, %p147
    %p150 = scmp.ne.s32.totalorder %s135, %s149
    %p151 = scmp.eq.s32.totalorder %s17, 0
    %p152 = por %p150, %p151
    %s154 = sadd.s32 %s153, 1
    %p157 = scmp.eq.s32.totalorder %s11, 3
    %p158 = scmp.ne.s32.totalorder %s153, %s155
    %p159 = scmp.eq.s32.totalorder %s11, 0
    %p160 = por %p158, %p159
    %p161 = scmp.ne.s32.totalorder %s153, %s155
    %p162 = scmp.eq.s32.totalorder %s16, 3
    %p163 = por %p161, %p162
    %p164 = scmp.ne.s32.totalorder %s155, %s156
    %p165 = scmp.eq.s32.totalorder %s16, 0
    %p166 = por %p164, %p165
    %p167 = scmp.ne.s32.totalorder %s155, %s156
    %p168 = scmp.eq.s32.totalorder %s17, 3
    %p169 = por %p167, %p168
    %p171 = scmp.ne.s32.totalorder %s156, %s170
    %p172 = scmp.eq.s32.totalorder %s17, 0
    %p173 = por %p171, %p172
    %s174 = ssub.s32 %s18, %s37
    %s175 = ssub.s32 %s19, %s33
    %s176 = sor.u32 %s174, %s175
    %s177 = ssub.s32 %s20, %s29
    %s178 = sor.u32 %s176, %s177
    %p179 = scmp.eq.s32.totalorder %s178, 0
    %s181 = sadd.s32 %s180, 1
    %s182 = scalar_select %p179, %s180, %s181
    %p185 = pneg %p179
    %p186 = scmp.eq.s32.totalorder %s11, 3
    %p187 = por %p185, %p186
    %p188 = scmp.ne.s32.totalorder %s180, %s183
    %p189 = scmp.eq.s32.totalorder %s11, 0
    %p190 = por %p188, %p189
    %p191 = scmp.ne.s32.totalorder %s180, %s183
    %p192 = scmp.eq.s32.totalorder %s16, 3
    %p193 = por %p191, %p192
    %p194 = scmp.ne.s32.totalorder %s183, %s184
    %p195 = scmp.eq.s32.totalorder %s16, 0
    %p196 = por %p194, %p195
    %p197 = scmp.ne.s32.totalorder %s183, %s184
    %p198 = scmp.eq.s32.totalorder %s17, 3
    %p199 = por %p197, %p198
    %p201 = scmp.ne.s32.totalorder %s184, %s200
    %p202 = scmp.eq.s32.totalorder %s17, 0
    %p203 = por %p201, %p202
    %p204 = scmp.le.s32.totalorder 1, %s11
    %p205 = scmp.lt.s32.totalorder %s11, 5
    %p206 = pnand %p204, %p205
    %p207 = pneg %p206
    // Predicated region
    $region9: #{keyvalue_pallas.1} parent=5 // pred_check
      _
    $region10: #{keyvalue_pallas.1} parent=5 // pred_check_branch
      %209 = sbr.rel (%p206) target = $region12
    $region11: #{keyvalue_pallas.1} parent=5 // pred_region
      %s210 = ssub.s32 %s11, 1
      // Predicated region
      $region13: #{keyvalue_pallas.1} parent=11 // pred_check
        %p211 = pneg %p145
      $region14: #{keyvalue_pallas.1} parent=11 // pred_check_branch
        %213 = sbr.rel (%p211) target = $region16
      $region15: #{keyvalue_pallas.1} parent=11 // pred_region
        _
      $region16: #{keyvalue_pallas.1} parent=11 // pred_fallthru
        _
      // Predicated region
      $region17: #{keyvalue_pallas.1} parent=11 // pred_check
        %p214 = pneg %p166
      $region18: #{keyvalue_pallas.1} parent=11 // pred_check_branch
        %216 = sbr.rel (%p214) target = $region20
      $region19: #{keyvalue_pallas.1} parent=11 // pred_region
        _
      $region20: #{keyvalue_pallas.1} parent=11 // pred_fallthru
        _
    $region12: #{keyvalue_pallas.1} parent=5 // pred_fallthru
      _
    %p217 = scmp.lt.s32.totalorder %s11, 4
    // Predicated region
    $region21: #{keyvalue_pallas.1} parent=5 // pred_check
      %p218 = pneg %p217
    $region22: #{keyvalue_pallas.1} parent=5 // pred_check_branch
      %220 = sbr.rel (%p218) target = $region24
    $region23: #{keyvalue_pallas.1} parent=5 // pred_region
      // Predicated region
      $region25: #{keyvalue_pallas.1} parent=23 // pred_check
        %p221 = pneg %p52
      $region26: #{keyvalue_pallas.1} parent=23 // pred_check_branch
        %223 = sbr.rel (%p221) target = $region28
      $region27: #{keyvalue_pallas.1} parent=23 // pred_region
        %s224 = smul.u32 8, %s19
        %s225 = ssub.s32 18, %s224
        %p226 = scmp.lt.s32.totalorder %s225, 8
        %s227 = scalar_select %p226, %s225, 8
        %s228 = smul.u32 64, %s227
        %s229 = smul.u32 %s228, 3
        %p230 = scmp.lt.s32.totalorder %s18, 1
        %s231 = scalar_select %p230, %s18, 1
        %p232 = scmp.lt.s32.totalorder %s224, 17
        %s233 = scalar_select %p232, %s224, 17
        %s234 = smul.addr %s233, 3
        %s235 = smul.addr %s231, 54
        %s236 = sadd.s32 %s234, %s235
        %s237 = smul.addr %s236, 4
        %s238 = scalar_lea.vmem %s0, %s237
        %s239 = smul.u32 8, %s19
        %s240 = ssub.s32 18, %s239
        %p241 = scmp.lt.s32.totalorder %s240, 8
        %s242 = scalar_select %p241, %s240, 8
        %s243 = smul.u32 64, %s242
        %s244 = smul.u32 %s243, 3
      $region28: #{keyvalue_pallas.1} parent=23 // pred_fallthru
        _
      // Predicated region
      $region29: #{keyvalue_pallas.1} parent=23 // pred_check
        %p245 = pneg %p84
      $region30: #{keyvalue_pallas.1} parent=23 // pred_check_branch
        %247 = sbr.rel (%p245) target = $region32
      $region31: #{keyvalue_pallas.1} parent=23 // pred_region
        %s248 = sadd.s32 %s19, 1
        %s249 = smul.u32 %s248, 8
        %p250 = scmp.lt.s32.totalorder %s18, 1
        %s251 = scalar_select %p250, %s18, 1
        %p252 = scmp.lt.s32.totalorder %s249, 17
        %s253 = scalar_select %p252, %s249, 17
        %s254 = smul.addr %s253, 3
        %s255 = smul.addr %s251, 54
        %s256 = sadd.s32 %s254, %s255
        %s257 = smul.addr %s256, 4
        %s258 = scalar_lea.vmem %s1, %s257
        %s259 = sadd.s32 %s19, 1
        %s260 = smul.u32 %s259, 8
      $region32: #{keyvalue_pallas.1} parent=23 // pred_fallthru
        _
      // Predicated region
      $region33: #{keyvalue_pallas.1} parent=23 // pred_check
        %p261 = pneg %p118
      $region34: #{keyvalue_pallas.1} parent=23 // pred_check_branch
        %263 = sbr.rel (%p261) target = $region36
      $region35: #{keyvalue_pallas.1} parent=23 // pred_region
        %s264 = sadd.s32 %s19, 1
        %s265 = smul.u32 %s264, 8
        %s266 = sadd.s32 %s265, 1
        %p267 = scmp.lt.s32.totalorder %s18, 1
        %s268 = scalar_select %p267, %s18, 1
        %p269 = scmp.lt.s32.totalorder %s266, 17
        %s270 = scalar_select %p269, %s266, 17
        %s271 = smul.addr %s270, 3
        %s272 = smul.addr %s268, 54
        %s273 = sadd.s32 %s271, %s272
        %s274 = smul.addr %s273, 4
        %s275 = scalar_lea.vmem %s2, %s274
        %s276 = sadd.s32 %s19, 1
        %s277 = smul.u32 %s276, 8
        %s278 = sadd.s32 %s277, 1
      $region36: #{keyvalue_pallas.1} parent=23 // pred_fallthru
        _
    $region24: #{keyvalue_pallas.1} parent=5 // pred_fallthru
      _
    %p279 = scmp.le.s32.totalorder 1, %s11
    %p280 = scmp.lt.s32.totalorder %s11, 5
    %p281 = pnand %p279, %p280
    %p282 = pneg %p281
    // Predicated region
    $region37: #{keyvalue_pallas.1} parent=5 // pred_check
      _
    $region38: #{keyvalue_pallas.1} parent=5 // pred_check_branch
      %284 = sbr.rel (%p281) target = $region40
    $region39: #{keyvalue_pallas.1} parent=5 // pred_region
      %s285 = ssub.s32 %s11, 1
      %s286 = smul.u32 8, %s22
      %s287 = ssub.s32 18, %s286
      %p288 = scmp.lt.s32.totalorder %s287, 8
      %s289 = scalar_select %p288, %s287, 8
      %s290 = smul.u32 64, %s289
      %s291 = smul.u32 %s290, 3
      %p292 = scmp.lt.s32.totalorder %s21, 1
      %s293 = scalar_select %p292, %s21, 1
      %p294 = scmp.lt.s32.totalorder %s286, 17
      %s295 = scalar_select %p294, %s286, 17
      %s296 = smul.addr %s295, 3
      %s297 = smul.addr %s293, 54
      %s298 = sadd.s32 %s296, %s297
      %s299 = smul.addr %s298, 4
      %s300 = scalar_lea.vmem %s0, %s299
      %p301 = pneg %p58
      %p302 = pneg %p55
      %s303 = sadd.s32 %s22, 1
      %s304 = smul.u32 %s303, 8
      %p305 = scmp.lt.s32.totalorder %s21, 1
      %s306 = scalar_select %p305, %s21, 1
      %p307 = scmp.lt.s32.totalorder %s304, 17
      %s308 = scalar_select %p307, %s304, 17
      %s309 = smul.addr %s308, 3
      %s310 = smul.addr %s306, 54
      %s311 = sadd.s32 %s309, %s310
      %s312 = smul.addr %s311, 4
      %s313 = scalar_lea.vmem %s1, %s312
      %p314 = pneg %p90
      %p315 = pneg %p87
      %s316 = sadd.s32 %s22, 1
      %s317 = smul.u32 %s316, 8
      %s318 = sadd.s32 %s317, 1
      %p319 = scmp.lt.s32.totalorder %s21, 1
      %s320 = scalar_select %p319, %s21, 1
      %p321 = scmp.lt.s32.totalorder %s318, 17
      %s322 = scalar_select %p321, %s318, 17
      %s323 = smul.addr %s322, 3
      %s324 = smul.addr %s320, 54
      %s325 = sadd.s32 %s323, %s324
      %s326 = smul.addr %s325, 4
      %s327 = scalar_lea.vmem %s2, %s326
      %p328 = pneg %p124
      %p329 = pneg %p121
      %p330 = pneg %p145
      %p331 = pneg %p142
      %p332 = pneg %p166
      %p333 = pneg %p163
      %p334 = pneg %p196
      %p335 = pneg %p193
      %s336 = smul.u32 16, %s22
      %p337 = scmp.lt.s32.totalorder %s21, 1
      %s338 = scalar_select %p337, %s21, 1
      %p339 = scmp.lt.s32.totalorder %s336, 31
      %s340 = scalar_select %p339, %s336, 31
      %p341 = scmp.lt.s32.totalorder %s23, 0
      %s342 = scalar_select %p341, %s23, 0
      %s343 = sadd.s32 %s342, %s340
      %s344 = smul.addr %s338, 32
      %s345 = sadd.s32 %s343, %s344
      %s346 = smul.addr %s345, 8
      %s347 = scalar_lea.vmem %s5, %s346
      %s348 = smul.u32 8, %s22
      %s349 = ssub.s32 18, %s348
      %p350 = scmp.lt.s32.totalorder %s349, 8
      %s351 = scalar_select %p350, %s349, 8
      %s352 = smul.u32 64, %s351
      %s353 = smul.u32 %s352, 3
      %p354 = scmp.lt.s32.totalorder %s21, 1
      %s355 = scalar_select %p354, %s21, 1
      %p356 = scmp.lt.s32.totalorder %s348, 17
      %s357 = scalar_select %p356, %s348, 17
      %s358 = smul.addr %s357, 3
      %s359 = smul.addr %s355, 54
      %s360 = sadd.s32 %s358, %s359
      %s361 = smul.addr %s360, 4
      %s362 = scalar_lea.vmem %s0, %s361
      %s363 = smul.u32 8, %s22
      %s364 = ssub.s32 18, %s363
      %p365 = scmp.lt.s32.totalorder %s364, 8
      %s366 = scalar_select %p365, %s364, 8
      %s367 = smul.u32 64, %s366
      %s368 = smul.u32 %s367, 3
      %s369 = sadd.s32 %s22, 1
      %s370 = smul.u32 %s369, 8
      %p371 = scmp.lt.s32.totalorder %s21, 1
      %s372 = scalar_select %p371, %s21, 1
      %p373 = scmp.lt.s32.totalorder %s370, 17
      %s374 = scalar_select %p373, %s370, 17
      %s375 = smul.addr %s374, 3
      %s376 = smul.addr %s372, 54
      %s377 = sadd.s32 %s375, %s376
      %s378 = smul.addr %s377, 4
      %s379 = scalar_lea.vmem %s1, %s378
      %s380 = sadd.s32 %s22, 1
      %s381 = smul.u32 %s380, 8
      %s382 = sadd.s32 %s22, 1
      %s383 = smul.u32 %s382, 8
      %s384 = sadd.s32 %s383, 1
      %p385 = scmp.lt.s32.totalorder %s21, 1
      %s386 = scalar_select %p385, %s21, 1
      %p387 = scmp.lt.s32.totalorder %s384, 17
      %s388 = scalar_select %p387, %s384, 17
      %s389 = smul.addr %s388, 3
      %s390 = smul.addr %s386, 54
      %s391 = sadd.s32 %s389, %s390
      %s392 = smul.addr %s391, 4
      %s393 = scalar_lea.vmem %s2, %s392
      %s394 = sadd.s32 %s22, 1
      %s395 = smul.u32 %s394, 8
      %s396 = sadd.s32 %s395, 1
      %s397 = smul.u32 16, %s22
      %p398 = scmp.lt.s32.totalorder %s21, 1
      %s399 = scalar_select %p398, %s21, 1
      %p400 = scmp.lt.s32.totalorder %s397, 31
      %s401 = scalar_select %p400, %s397, 31
      %p402 = scmp.lt.s32.totalorder %s23, 0
      %s403 = scalar_select %p402, %s23, 0
      %s404 = sadd.s32 %s403, %s401
      %s405 = smul.addr %s399, 32
      %s406 = sadd.s32 %s404, %s405
      %s407 = smul.addr %s406, 8
      %s408 = scalar_lea.vmem %s5, %s407
      %s409 = smul.u32 16, %s22
      %v411 = vld [vmem:[%s362] sm:$0xf]
      %v412 = vld [vmem:[%s362 + $0x4] sm:$0xf]
      %v413 = vld [vmem:[%s362 + $0x8] sm:$0x1]
      %v414 = vld [vmem:[%s362 + $0xc] sm:$0xf]
      %v415 = vld [vmem:[%s362 + $0x10] sm:$0xf]
      %v416 = vld [vmem:[%s362 + $0x14] sm:$0x1]
      %v417 = vld [vmem:[%s362 + $0x18] sm:$0xf]
      %v418 = vld [vmem:[%s362 + $0x1c] sm:$0xf]
      %v419 = vld [vmem:[%s362 + $0x20] sm:$0x1]
      %v420 = vld [vmem:[%s362 + $0x24] sm:$0xf]
      %v421 = vld [vmem:[%s362 + $0x28] sm:$0xf]
      %v422 = vld [vmem:[%s362 + $0x2c] sm:$0x1]
      %v423 = vld [vmem:[%s362 + $0x30] sm:$0xf]
      %v424 = vld [vmem:[%s362 + $0x34] sm:$0xf]
      %v425 = vld [vmem:[%s362 + $0x38] sm:$0x1]
      %v426 = vld [vmem:[%s362 + $0x3c] sm:$0xf]
      %v427 = vld [vmem:[%s362 + $0x40] sm:$0xf]
      %v428 = vld [vmem:[%s362 + $0x44] sm:$0x1]
      %v429 = vld [vmem:[%s362 + $0x48] sm:$0xf]
      %v430 = vld [vmem:[%s362 + $0x4c] sm:$0xf]
      %v431 = vld [vmem:[%s362 + $0x50] sm:$0x1]
      %v432 = vld [vmem:[%s362 + $0x54] sm:$0xf]
      %v433 = vld [vmem:[%s362 + $0x58] sm:$0xf]
      %v434 = vld [vmem:[%s362 + $0x5c] sm:$0x1]
      %v435 = vld [vmem:[%s379] sm:$0xf]
      %v436 = vld [vmem:[%s379 + $0x4] sm:$0xf]
      %v437 = vld [vmem:[%s379 + $0x8] sm:$0x1]
      %v438 = vld [vmem:[%s393] sm:$0xf]
      %v439 = vld [vmem:[%s393 + $0x4] sm:$0xf]
      %v440 = vld [vmem:[%s393 + $0x8] sm:$0x1]
      %v441 = vld [vmem:[%s3] sm:$0xf]
      %v442 = vld [vmem:[%s3 + $0x4] sm:$0xf]
      %v443 = vld [vmem:[%s3 + $0x8] sm:$0xf]
      %v444 = vld [vmem:[%s3 + $0xc] sm:$0xf]
      %v445 = vld [vmem:[%s3 + $0x10] sm:$0xf]
      %v446 = vld [vmem:[%s3 + $0x14] sm:$0xf]
      %v447 = vld [vmem:[%s3 + $0x18] sm:$0xf]
      %v448 = vld [vmem:[%s3 + $0x1c] sm:$0xf]
      %v449 = vld [vmem:[%s3 + $0x20] sm:$0xf]
      %v450 = vld [vmem:[%s4] sm:$0x1]
      %vm451 = vsmask.f32 3328
      %vm452 = vsmask.f32 7440
      %vm453 = vmor %vm451, %vm452
      %v455 = vshrl.u32 %v411, 16
      %v457 = vrot.slane %v455, 4
      %v458 = vshll.u32 %v411, 16
      %v460 = vrot.slane %v458, 5
      %v461 = vor.u32 %v457, %v460
      %v462 = vrot.slane %v461, 4
      %v464 = vshll.u32 %v412, 16
      %v466 = vrot.slane %v464, 5
      %v467 = vsel %vm453, %v462, %v466
      %v468 = vshrl.u32 %v412, 16
      %v470 = vrot.slane %v468, 4
      %v471 = vor.u32 %v470, %v466
      %v472 = vrot.slane %v471, 4
      %v474 = vshll.u32 %v413, 16
      %v476 = vrot.slane %v474, 5
      %v477 = vsel %vm453, %v472, %v476
      %v479 = vshrl.u32 %v414, 16
      %v481 = vrot.slane %v479, 4
      %v482 = vshll.u32 %v414, 16
      %v484 = vrot.slane %v482, 5
      %v485 = vor.u32 %v481, %v484
      %v486 = vrot.slane %v485, 4
      %v488 = vshll.u32 %v415, 16
      %v490 = vrot.slane %v488, 5
      %v491 = vsel %vm453, %v486, %v490
      %v492 = vshrl.u32 %v415, 16
      %v494 = vrot.slane %v492, 4
      %v495 = vor.u32 %v494, %v490
      %v496 = vrot.slane %v495, 4
      %v498 = vshll.u32 %v416, 16
      %v500 = vrot.slane %v498, 5
      %v501 = vsel %vm453, %v496, %v500
      %v503 = vshrl.u32 %v417, 16
      %v505 = vrot.slane %v503, 4
      %v506 = vshll.u32 %v417, 16
      %v508 = vrot.slane %v506, 5
      %v509 = vor.u32 %v505, %v508
      %v510 = vrot.slane %v509, 4
      %v512 = vshll.u32 %v418, 16
      %v514 = vrot.slane %v512, 5
      %v515 = vsel %vm453, %v510, %v514
      %v516 = vshrl.u32 %v418, 16
      %v518 = vrot.slane %v516, 4
      %v519 = vor.u32 %v518, %v514
      %v520 = vrot.slane %v519, 4
      %v522 = vshll.u32 %v419, 16
      %v524 = vrot.slane %v522, 5
      %v525 = vsel %vm453, %v520, %v524
      %v527 = vshrl.u32 %v420, 16
      %v529 = vrot.slane %v527, 4
      %v530 = vshll.u32 %v420, 16
      %v532 = vrot.slane %v530, 5
      %v533 = vor.u32 %v529, %v532
      %v534 = vrot.slane %v533, 4
      %v536 = vshll.u32 %v421, 16
      %v538 = vrot.slane %v536, 5
      %v539 = vsel %vm453, %v534, %v538
      %v540 = vshrl.u32 %v421, 16
      %v542 = vrot.slane %v540, 4
      %v543 = vor.u32 %v542, %v538
      %v544 = vrot.slane %v543, 4
      %v546 = vshll.u32 %v422, 16
      %v548 = vrot.slane %v546, 5
      %v549 = vsel %vm453, %v544, %v548
      %v551 = vshrl.u32 %v423, 16
      %v553 = vrot.slane %v551, 4
      %v554 = vshll.u32 %v423, 16
      %v556 = vrot.slane %v554, 5
      %v557 = vor.u32 %v553, %v556
      %v558 = vrot.slane %v557, 4
      %v560 = vshll.u32 %v424, 16
      %v562 = vrot.slane %v560, 5
      %v563 = vsel %vm453, %v558, %v562
      %v564 = vshrl.u32 %v424, 16
      %v566 = vrot.slane %v564, 4
      %v567 = vor.u32 %v566, %v562
      %v568 = vrot.slane %v567, 4
      %v570 = vshll.u32 %v425, 16
      %v572 = vrot.slane %v570, 5
      %v573 = vsel %vm453, %v568, %v572
      %v575 = vshrl.u32 %v426, 16
      %v577 = vrot.slane %v575, 4
      %v578 = vshll.u32 %v426, 16
      %v580 = vrot.slane %v578, 5
      %v581 = vor.u32 %v577, %v580
      %v582 = vrot.slane %v581, 4
      %v584 = vshll.u32 %v427, 16
      %v586 = vrot.slane %v584, 5
      %v587 = vsel %vm453, %v582, %v586
      %v588 = vshrl.u32 %v427, 16
      %v590 = vrot.slane %v588, 4
      %v591 = vor.u32 %v590, %v586
      %v592 = vrot.slane %v591, 4
      %v594 = vshll.u32 %v428, 16
      %v596 = vrot.slane %v594, 5
      %v597 = vsel %vm453, %v592, %v596
      %v599 = vshrl.u32 %v429, 16
      %v601 = vrot.slane %v599, 4
      %v602 = vshll.u32 %v429, 16
      %v604 = vrot.slane %v602, 5
      %v605 = vor.u32 %v601, %v604
      %v606 = vrot.slane %v605, 4
      %v608 = vshll.u32 %v430, 16
      %v610 = vrot.slane %v608, 5
      %v611 = vsel %vm453, %v606, %v610
      %v612 = vshrl.u32 %v430, 16
      %v614 = vrot.slane %v612, 4
      %v615 = vor.u32 %v614, %v610
      %v616 = vrot.slane %v615, 4
      %v618 = vshll.u32 %v431, 16
      %v620 = vrot.slane %v618, 5
      %v621 = vsel %vm453, %v616, %v620
      %v623 = vshrl.u32 %v432, 16
      %v625 = vrot.slane %v623, 4
      %v626 = vshll.u32 %v432, 16
      %v628 = vrot.slane %v626, 5
      %v629 = vor.u32 %v625, %v628
      %v630 = vrot.slane %v629, 4
      %v632 = vshll.u32 %v433, 16
      %v634 = vrot.slane %v632, 5
      %v635 = vsel %vm453, %v630, %v634
      %v636 = vshrl.u32 %v433, 16
      %v638 = vrot.slane %v636, 4
      %v639 = vor.u32 %v638, %v634
      %v640 = vrot.slane %v639, 4
      %v642 = vshll.u32 %v434, 16
      %v644 = vrot.slane %v642, 5
      %v645 = vsel %vm453, %v640, %v644
      %vm670 = vcmask 1042432
      %vm671 = vcmask 1046532
      %vm672 = vmor %vm670, %vm671
      %v673 = vrot.slane %v411, 5
      %v674 = vrot.slane %v673, 4
      %v675 = vrot.slane %v412, 5
      %v676 = vsel %vm672, %v674, %v675
      %v677 = vrot.slane %v675, 4
      %v678 = vrot.slane %v413, 5
      %v679 = vsel %vm672, %v677, %v678
      %v680 = vrot.slane %v414, 5
      %v681 = vrot.slane %v680, 4
      %v682 = vrot.slane %v415, 5
      %v683 = vsel %vm672, %v681, %v682
      %v684 = vrot.slane %v682, 4
      %v685 = vrot.slane %v416, 5
      %v686 = vsel %vm672, %v684, %v685
      %v687 = vrot.slane %v417, 5
      %v688 = vrot.slane %v687, 4
      %v689 = vrot.slane %v418, 5
      %v690 = vsel %vm672, %v688, %v689
      %v691 = vrot.slane %v689, 4
      %v692 = vrot.slane %v419, 5
      %v693 = vsel %vm672, %v691, %v692
      %v694 = vrot.slane %v420, 5
      %v695 = vrot.slane %v694, 4
      %v696 = vrot.slane %v421, 5
      %v697 = vsel %vm672, %v695, %v696
      %v698 = vrot.slane %v696, 4
      %v699 = vrot.slane %v422, 5
      %v700 = vsel %vm672, %v698, %v699
      %v701 = vrot.slane %v423, 5
      %v702 = vrot.slane %v701, 4
      %v703 = vrot.slane %v424, 5
      %v704 = vsel %vm672, %v702, %v703
      %v705 = vrot.slane %v703, 4
      %v706 = vrot.slane %v425, 5
      %v707 = vsel %vm672, %v705, %v706
      %v708 = vrot.slane %v426, 5
      %v709 = vrot.slane %v708, 4
      %v710 = vrot.slane %v427, 5
      %v711 = vsel %vm672, %v709, %v710
      %v712 = vrot.slane %v710, 4
      %v713 = vrot.slane %v428, 5
      %v714 = vsel %vm672, %v712, %v713
      %v715 = vrot.slane %v429, 5
      %v716 = vrot.slane %v715, 4
      %v717 = vrot.slane %v430, 5
      %v718 = vsel %vm672, %v716, %v717
      %v719 = vrot.slane %v717, 4
      %v720 = vrot.slane %v431, 5
      %v721 = vsel %vm672, %v719, %v720
      %v722 = vrot.slane %v432, 5
      %v723 = vrot.slane %v722, 4
      %v724 = vrot.slane %v433, 5
      %v725 = vsel %vm672, %v723, %v724
      %v726 = vrot.slane %v724, 4
      %v727 = vrot.slane %v434, 5
      %v728 = vsel %vm672, %v726, %v727
      %v730 = vshrl.u32 %v435, 16
      %v732 = vrot.slane %v730, 4
      %v733 = vshll.u32 %v435, 16
      %v735 = vrot.slane %v733, 5
      %v736 = vor.u32 %v732, %v735
      %v737 = vrot.slane %v736, 4
      %v739 = vshll.u32 %v436, 16
      %v741 = vrot.slane %v739, 5
      %v742 = vsel %vm453, %v737, %v741
      %v743 = vshrl.u32 %v436, 16
      %v745 = vrot.slane %v743, 4
      %v746 = vor.u32 %v745, %v741
      %v747 = vrot.slane %v746, 4
      %v749 = vshll.u32 %v437, 16
      %v751 = vrot.slane %v749, 5
      %v752 = vsel %vm453, %v747, %v751
      %v756 = vrot.slane %v435, 5
      %v757 = vrot.slane %v756, 4
      %v758 = vrot.slane %v436, 5
      %v759 = vsel %vm672, %v757, %v758
      %v760 = vrot.slane %v758, 4
      %v761 = vrot.slane %v437, 5
      %v762 = vsel %vm672, %v760, %v761
      %v764 = vshrl.u32 %v438, 16
      %v766 = vrot.slane %v764, 4
      %v767 = vshll.u32 %v438, 16
      %v769 = vrot.slane %v767, 5
      %v770 = vor.u32 %v766, %v769
      %v771 = vrot.slane %v770, 4
      %v773 = vshll.u32 %v439, 16
      %v775 = vrot.slane %v773, 5
      %v776 = vsel %vm453, %v771, %v775
      %v777 = vshrl.u32 %v439, 16
      %v779 = vrot.slane %v777, 4
      %v780 = vor.u32 %v779, %v775
      %v781 = vrot.slane %v780, 4
      %v783 = vshll.u32 %v440, 16
      %v785 = vrot.slane %v783, 5
      %v786 = vsel %vm453, %v781, %v785
      %v790 = vrot.slane %v438, 5
      %v791 = vrot.slane %v790, 4
      %v792 = vrot.slane %v439, 5
      %v793 = vsel %vm672, %v791, %v792
      %v794 = vrot.slane %v792, 4
      %v795 = vrot.slane %v440, 5
      %v796 = vsel %vm672, %v794, %v795
      %v797 = vunpack.c.l.b16 %v411
      %v798 = vunpack.c.l.b16 %v412
      %v799 = vunpack.c.l.b16 %v414
      %v800 = vunpack.c.l.b16 %v415
      %v801 = vunpack.c.l.b16 %v417
      %v802 = vunpack.c.l.b16 %v418
      %v803 = vunpack.c.l.b16 %v420
      %v804 = vunpack.c.l.b16 %v421
      %v805 = vunpack.c.l.b16 %v423
      %v806 = vunpack.c.l.b16 %v424
      %v807 = vunpack.c.l.b16 %v426
      %v808 = vunpack.c.l.b16 %v427
      %v809 = vunpack.c.l.b16 %v429
      %v810 = vunpack.c.l.b16 %v430
      %v811 = vunpack.c.l.b16 %v432
      %v812 = vunpack.c.l.b16 %v433
      %v813 = vpack.c.b16 %v798, %v797
      %v814 = vpack.c.b16 %v800, %v799
      %v815 = vpack.c.b16 %v802, %v801
      %v816 = vpack.c.b16 %v804, %v803
      %v817 = vpack.c.b16 %v806, %v805
      %v818 = vpack.c.b16 %v808, %v807
      %v819 = vpack.c.b16 %v810, %v809
      %v820 = vpack.c.b16 %v812, %v811
      %v821 = vunpack.c.l.b16 %v467
      %v822 = vunpack.c.l.b16 %v477
      %v823 = vunpack.c.l.b16 %v491
      %v824 = vunpack.c.l.b16 %v501
      %v825 = vunpack.c.l.b16 %v515
      %v826 = vunpack.c.l.b16 %v525
      %v827 = vunpack.c.l.b16 %v539
      %v828 = vunpack.c.l.b16 %v549
      %v829 = vunpack.c.l.b16 %v563
      %v830 = vunpack.c.l.b16 %v573
      %v831 = vunpack.c.l.b16 %v587
      %v832 = vunpack.c.l.b16 %v597
      %v833 = vunpack.c.l.b16 %v611
      %v834 = vunpack.c.l.b16 %v621
      %v835 = vunpack.c.l.b16 %v635
      %v836 = vunpack.c.l.b16 %v645
      %v837 = vpack.c.b16 %v822, %v821
      %v838 = vpack.c.b16 %v824, %v823
      %v839 = vpack.c.b16 %v826, %v825
      %v840 = vpack.c.b16 %v828, %v827
      %v841 = vpack.c.b16 %v830, %v829
      %v842 = vpack.c.b16 %v832, %v831
      %v843 = vpack.c.b16 %v834, %v833
      %v844 = vpack.c.b16 %v836, %v835
      %845 = vrot.lane.b32.xlu0 %v837, 8
      %v846 = vpop.permute.xlu0 %845
      %847 = vrot.lane.b32.xlu0 %v838, 8
      %v848 = vpop.permute.xlu0 %847
      %849 = vrot.lane.b32.xlu0 %v839, 8
      %v850 = vpop.permute.xlu0 %849
      %851 = vrot.lane.b32.xlu0 %v840, 8
      %v852 = vpop.permute.xlu0 %851
      %853 = vrot.lane.b32.xlu0 %v841, 8
      %v854 = vpop.permute.xlu0 %853
      %855 = vrot.lane.b32.xlu0 %v842, 8
      %v856 = vpop.permute.xlu0 %855
      %857 = vrot.lane.b32.xlu0 %v843, 8
      %v858 = vpop.permute.xlu0 %857
      %859 = vrot.lane.b32.xlu0 %v844, 8
      %v860 = vpop.permute.xlu0 %859
      %v861 = vunpack.c.l.b16 %v676
      %v862 = vunpack.c.l.b16 %v679
      %v863 = vunpack.c.l.b16 %v683
      %v864 = vunpack.c.l.b16 %v686
      %v865 = vunpack.c.l.b16 %v690
      %v866 = vunpack.c.l.b16 %v693
      %v867 = vunpack.c.l.b16 %v697
      %v868 = vunpack.c.l.b16 %v700
      %v869 = vunpack.c.l.b16 %v704
      %v870 = vunpack.c.l.b16 %v707
      %v871 = vunpack.c.l.b16 %v711
      %v872 = vunpack.c.l.b16 %v714
      %v873 = vunpack.c.l.b16 %v718
      %v874 = vunpack.c.l.b16 %v721
      %v875 = vunpack.c.l.b16 %v725
      %v876 = vunpack.c.l.b16 %v728
      %v877 = vpack.c.b16 %v862, %v861
      %v878 = vpack.c.b16 %v864, %v863
      %v879 = vpack.c.b16 %v866, %v865
      %v880 = vpack.c.b16 %v868, %v867
      %v881 = vpack.c.b16 %v870, %v869
      %v882 = vpack.c.b16 %v872, %v871
      %v883 = vpack.c.b16 %v874, %v873
      %v884 = vpack.c.b16 %v876, %v875
      %885 = vrot.lane.b32.xlu0 %v877, 16
      %v886 = vpop.permute.xlu0 %885
      %887 = vrot.lane.b32.xlu0 %v878, 16
      %v888 = vpop.permute.xlu0 %887
      %889 = vrot.lane.b32.xlu0 %v879, 16
      %v890 = vpop.permute.xlu0 %889
      %891 = vrot.lane.b32.xlu0 %v880, 16
      %v892 = vpop.permute.xlu0 %891
      %893 = vrot.lane.b32.xlu0 %v881, 16
      %v894 = vpop.permute.xlu0 %893
      %895 = vrot.lane.b32.xlu0 %v882, 16
      %v896 = vpop.permute.xlu0 %895
      %897 = vrot.lane.b32.xlu0 %v883, 16
      %v898 = vpop.permute.xlu0 %897
      %899 = vrot.lane.b32.xlu0 %v884, 16
      %v900 = vpop.permute.xlu0 %899
      %v901 = vunpack.c.l.b16 %v435
      %v902 = vunpack.c.l.b16 %v436
      %v903 = vpack.c.b16 %v902, %v901
      %904 = vrot.lane.b32.xlu0 %v814, 24
      %v905 = vpop.permute.xlu0 %904
      %906 = vrot.lane.b32.xlu0 %v815, 24
      %v907 = vpop.permute.xlu0 %906
      %908 = vrot.lane.b32.xlu0 %v816, 24
      %v909 = vpop.permute.xlu0 %908
      %910 = vrot.lane.b32.xlu0 %v817, 24
      %v911 = vpop.permute.xlu0 %910
      %912 = vrot.lane.b32.xlu0 %v818, 24
      %v913 = vpop.permute.xlu0 %912
      %914 = vrot.lane.b32.xlu0 %v819, 24
      %v915 = vpop.permute.xlu0 %914
      %916 = vrot.lane.b32.xlu0 %v820, 24
      %v917 = vpop.permute.xlu0 %916
      %918 = vrot.lane.b32.xlu0 %v903, 24
      %v919 = vpop.permute.xlu0 %918
      %v920 = vunpack.c.l.b16 %v742
      %v921 = vunpack.c.l.b16 %v752
      %v922 = vpack.c.b16 %v921, %v920
      %923 = vrot.lane.b32.xlu0 %v838, 32
      %v924 = vpop.permute.xlu0 %923
      %925 = vrot.lane.b32.xlu0 %v839, 32
      %v926 = vpop.permute.xlu0 %925
      %927 = vrot.lane.b32.xlu0 %v840, 32
      %v928 = vpop.permute.xlu0 %927
      %929 = vrot.lane.b32.xlu0 %v841, 32
      %v930 = vpop.permute.xlu0 %929
      %931 = vrot.lane.b32.xlu0 %v842, 32
      %v932 = vpop.permute.xlu0 %931
      %933 = vrot.lane.b32.xlu0 %v843, 32
      %v934 = vpop.permute.xlu0 %933
      %935 = vrot.lane.b32.xlu0 %v844, 32
      %v936 = vpop.permute.xlu0 %935
      %937 = vrot.lane.b32.xlu0 %v922, 32
      %v938 = vpop.permute.xlu0 %937
      %v939 = vunpack.c.l.b16 %v759
      %v940 = vunpack.c.l.b16 %v762
      %v941 = vpack.c.b16 %v940, %v939
      %942 = vrot.lane.b32.xlu0 %v878, 40
      %v943 = vpop.permute.xlu0 %942
      %944 = vrot.lane.b32.xlu0 %v879, 40
      %v945 = vpop.permute.xlu0 %944
      %946 = vrot.lane.b32.xlu0 %v880, 40
      %v947 = vpop.permute.xlu0 %946
      %948 = vrot.lane.b32.xlu0 %v881, 40
      %v949 = vpop.permute.xlu0 %948
      %950 = vrot.lane.b32.xlu0 %v882, 40
      %v951 = vpop.permute.xlu0 %950
      %952 = vrot.lane.b32.xlu0 %v883, 40
      %v953 = vpop.permute.xlu0 %952
      %954 = vrot.lane.b32.xlu0 %v884, 40
      %v955 = vpop.permute.xlu0 %954
      %956 = vrot.lane.b32.xlu0 %v941, 40
      %v957 = vpop.permute.xlu0 %956
      %v958 = vunpack.c.l.b16 %v438
      %v959 = vunpack.c.l.b16 %v439
      %v960 = vpack.c.b16 %v959, %v958
      %961 = vrot.lane.b32.xlu0 %v815, 48
      %v962 = vpop.permute.xlu0 %961
      %963 = vrot.lane.b32.xlu0 %v816, 48
      %v964 = vpop.permute.xlu0 %963
      %965 = vrot.lane.b32.xlu0 %v817, 48
      %v966 = vpop.permute.xlu0 %965
      %967 = vrot.lane.b32.xlu0 %v818, 48
      %v968 = vpop.permute.xlu0 %967
      %969 = vrot.lane.b32.xlu0 %v819, 48
      %v970 = vpop.permute.xlu0 %969
      %971 = vrot.lane.b32.xlu0 %v820, 48
      %v972 = vpop.permute.xlu0 %971
      %973 = vrot.lane.b32.xlu0 %v903, 48
      %v974 = vpop.permute.xlu0 %973
      %975 = vrot.lane.b32.xlu0 %v960, 48
      %v976 = vpop.permute.xlu0 %975
      %v977 = vunpack.c.l.b16 %v776
      %v978 = vunpack.c.l.b16 %v786
      %v979 = vpack.c.b16 %v978, %v977
      %980 = vrot.lane.b32.xlu0 %v839, 56
      %v981 = vpop.permute.xlu0 %980
      %982 = vrot.lane.b32.xlu0 %v840, 56
      %v983 = vpop.permute.xlu0 %982
      %984 = vrot.lane.b32.xlu0 %v841, 56
      %v985 = vpop.permute.xlu0 %984
      %986 = vrot.lane.b32.xlu0 %v842, 56
      %v987 = vpop.permute.xlu0 %986
      %988 = vrot.lane.b32.xlu0 %v843, 56
      %v989 = vpop.permute.xlu0 %988
      %990 = vrot.lane.b32.xlu0 %v844, 56
      %v991 = vpop.permute.xlu0 %990
      %992 = vrot.lane.b32.xlu0 %v922, 56
      %v993 = vpop.permute.xlu0 %992
      %994 = vrot.lane.b32.xlu0 %v979, 56
      %v995 = vpop.permute.xlu0 %994
      %v996 = vunpack.c.l.b16 %v793
      %v997 = vunpack.c.l.b16 %v796
      %v998 = vpack.c.b16 %v997, %v996
      %999 = vrot.lane.b32.xlu0 %v879, 64
      %v1000 = vpop.permute.xlu0 %999
      %1001 = vrot.lane.b32.xlu0 %v880, 64
      %v1002 = vpop.permute.xlu0 %1001
      %1003 = vrot.lane.b32.xlu0 %v881, 64
      %v1004 = vpop.permute.xlu0 %1003
      %1005 = vrot.lane.b32.xlu0 %v882, 64
      %v1006 = vpop.permute.xlu0 %1005
      %1007 = vrot.lane.b32.xlu0 %v883, 64
      %v1008 = vpop.permute.xlu0 %1007
      %1009 = vrot.lane.b32.xlu0 %v884, 64
      %v1010 = vpop.permute.xlu0 %1009
      %1011 = vrot.lane.b32.xlu0 %v941, 64
      %v1012 = vpop.permute.xlu0 %1011
      %1013 = vrot.lane.b32.xlu0 %v998, 64
      %v1014 = vpop.permute.xlu0 %1013
      %vm1015 = vcmask 64512
      %v1018 = vsel %vm1015, %v813, %v846
      %v1021 = vsel %vm1015, %v814, %v848
      %v1024 = vsel %vm1015, %v815, %v850
      %v1027 = vsel %vm1015, %v816, %v852
      %v1030 = vsel %vm1015, %v817, %v854
      %v1033 = vsel %vm1015, %v818, %v856
      %v1036 = vsel %vm1015, %v819, %v858
      %v1039 = vsel %vm1015, %v820, %v860
      %vm1040 = vcmask 130048
      %v1042 = vsel %vm1040, %v1018, %v886
      %v1044 = vsel %vm1040, %v1021, %v888
      %v1046 = vsel %vm1040, %v1024, %v890
      %v1048 = vsel %vm1040, %v1027, %v892
      %v1050 = vsel %vm1040, %v1030, %v894
      %v1052 = vsel %vm1040, %v1033, %v896
      %v1054 = vsel %vm1040, %v1036, %v898
      %v1056 = vsel %vm1040, %v1039, %v900
      %vm1057 = vcmask 195584
      %v1059 = vsel %vm1057, %v1042, %v905
      %v1061 = vsel %vm1057, %v1044, %v907
      %v1063 = vsel %vm1057, %v1046, %v909
      %v1065 = vsel %vm1057, %v1048, %v911
      %v1067 = vsel %vm1057, %v1050, %v913
      %v1069 = vsel %vm1057, %v1052, %v915
      %v1071 = vsel %vm1057, %v1054, %v917
      %v1073 = vsel %vm1057, %v1056, %v919
      %vm1074 = vcmask 261120
      %v1076 = vsel %vm1074, %v1059, %v924
      %v1078 = vsel %vm1074, %v1061, %v926
      %v1080 = vsel %vm1074, %v1063, %v928
      %v1082 = vsel %vm1074, %v1065, %v930
      %v1084 = vsel %vm1074, %v1067, %v932
      %v1086 = vsel %vm1074, %v1069, %v934
      %v1088 = vsel %vm1074, %v1071, %v936
      %v1090 = vsel %vm1074, %v1073, %v938
      %vm1091 = vcmask 326656
      %v1093 = vsel %vm1091, %v1076, %v943
      %v1095 = vsel %vm1091, %v1078, %v945
      %v1097 = vsel %vm1091, %v1080, %v947
      %v1099 = vsel %vm1091, %v1082, %v949
      %v1101 = vsel %vm1091, %v1084, %v951
      %v1103 = vsel %vm1091, %v1086, %v953
      %v1105 = vsel %vm1091, %v1088, %v955
      %v1107 = vsel %vm1091, %v1090, %v957
      %vm1108 = vcmask 392192
      %v1110 = vsel %vm1108, %v1093, %v962
      %v1112 = vsel %vm1108, %v1095, %v964
      %v1114 = vsel %vm1108, %v1097, %v966
      %v1116 = vsel %vm1108, %v1099, %v968
      %v1118 = vsel %vm1108, %v1101, %v970
      %v1120 = vsel %vm1108, %v1103, %v972
      %v1122 = vsel %vm1108, %v1105, %v974
      %v1124 = vsel %vm1108, %v1107, %v976
      %vm1125 = vcmask 457728
      %v1127 = vsel %vm1125, %v1110, %v981
      %v1129 = vsel %vm1125, %v1112, %v983
      %v1131 = vsel %vm1125, %v1114, %v985
      %v1133 = vsel %vm1125, %v1116, %v987
      %v1135 = vsel %vm1125, %v1118, %v989
      %v1137 = vsel %vm1125, %v1120, %v991
      %v1139 = vsel %vm1125, %v1122, %v993
      %v1141 = vsel %vm1125, %v1124, %v995
      %vm1142 = vcmask 523264
      %v1144 = vsel %vm1142, %v1127, %v1000
      %v1146 = vsel %vm1142, %v1129, %v1002
      %v1148 = vsel %vm1142, %v1131, %v1004
      %v1150 = vsel %vm1142, %v1133, %v1006
      %v1152 = vsel %vm1142, %v1135, %v1008
      %v1154 = vsel %vm1142, %v1137, %v1010
      %v1156 = vsel %vm1142, %v1139, %v1012
      %v1158 = vsel %vm1142, %v1141, %v1014
      %v1160 = vlaneseq
      %v1161 = vshrl.u32 %v1160, 7
      %v1162 = vsub.s32 0, %v1161
      %v1163 = vrot.slane %v450, %v1162
      %v1174 = vunpack.c.l.b16 %v441
      %v1175 = vunpack.c.l.b16 %v442
      %v1176 = vunpack.c.l.b16 %v443
      %v1177 = vunpack.c.l.b16 %v444
      %v1178 = vunpack.c.l.b16 %v445
      %v1179 = vunpack.c.l.b16 %v446
      %v1180 = vunpack.c.l.b16 %v447
      %v1181 = vunpack.c.l.b16 %v448
      %v1182 = vunpack.c.l.b16 %v449
      %v1183 = vpack.c.b16 %v1175, %v1174
      %v1184 = vpack.c.b16 %v1177, %v1176
      %v1185 = vpack.c.b16 %v1179, %v1178
      %v1186 = vpack.c.b16 %v1181, %v1180
      %v1187 = vpack.c.b16 %v1182, %v1182
      %vm1192 = vcmask 588800
      %v1193 = vsel %vm1192, %v1144, 0
      %v1195 = vsel %vm1192, %v1146, 0
      %v1197 = vsel %vm1192, %v1148, 0
      %v1199 = vsel %vm1192, %v1150, 0
      %v1201 = vsel %vm1192, %v1152, 0
      %v1203 = vsel %vm1192, %v1154, 0
      %v1205 = vsel %vm1192, %v1156, 0
      %v1207 = vsel %vm1192, %v1158, 0
      %vm1209 = vcmask 1043456
      %v1211 = vsel %vm1209, %v1187, 0
      %1213 = vmatprep.subr.bf16.mxu0 0
      %1214 = vmatpush1.bf16.msra.mxu0 0
      %1215 = vmatprep.subr.bf16.mxu0 0
      %1216 = vmatpush1.bf16.msra.mxu0 0
      %1217 = vmatprep.subr.bf16.mxu0 0
      %1218 = vmatpush1.bf16.msra.mxu0 0
      %1219 = vmatprep.subr.bf16.mxu0 0
      %1220 = vmatpush1.bf16.msra.mxu0 %v1211
      %1221 = vmatprep.subr.bf16.mxu0 0
      %1222 = vmatpush1.bf16.msra.mxu0 %v1186
      %1223 = vmatprep.subr.bf16.mxu0 0
      %1224 = vmatpush1.bf16.msra.mxu0 %v1185
      %1225 = vmatprep.subr.bf16.mxu0 0
      %1226 = vmatpush1.bf16.msra.mxu0 %v1184
      %1227 = vmatprep.subr.bf16.mxu0 0
      %1228 = vmatpush1.bf16.msra.mxu0 %v1183
      %1229 = vmatprep.subr.bf16.mxu0 0
      %1230 = vmatpush2.bf16.msra.mxu0 0
      %1231 = vmatprep.subr.bf16.mxu0 0
      %1232 = vmatpush2.bf16.msra.mxu0 0
      %1233 = vmatprep.subr.bf16.mxu0 0
      %1234 = vmatpush2.bf16.msra.mxu0 0
      %1235 = vmatprep.subr.bf16.mxu0 0
      %1236 = vmatpush2.bf16.msra.mxu0 0
      %1237 = vmatprep.subr.bf16.mxu0 0
      %1238 = vmatpush2.bf16.msra.mxu0 0
      %1239 = vmatprep.subr.bf16.mxu0 0
      %1240 = vmatpush2.bf16.msra.mxu0 0
      %1241 = vmatprep.subr.bf16.mxu0 0
      %1242 = vmatpush2.bf16.msra.mxu0 0
      %1243 = vmatprep.subr.bf16.mxu0 0
      %1244 = vmatpush2.bf16.msra.mxu0 0
      %1245 = vmatprep.mubr.bf16.mxu0 0
      %1246 = vmatmul.mubr.bf16.gmra.mxu0 %v1193
      %v1247 = vpop.f32.mrf.mxu0
      %v1248 = vadd.f32 %v1163, %v1247
      %v1249 = vpop.f32.mrf.mxu0
      %v1250 = vpop.f32.mrf.mxu0
      %v1251 = vadd.f32 %v1163, %v1250
      %v1252 = vpop.f32.mrf.mxu0
      %1253 = vmatprep.mubr.bf16.mxu0 0
      %1254 = vmatmul.mubr.bf16.gmra.mxu0 %v1195
      %v1255 = vpop.f32.mrf.mxu0
      %v1256 = vadd.f32 %v1163, %v1255
      %v1257 = vpop.f32.mrf.mxu0
      %v1258 = vpop.f32.mrf.mxu0
      %v1259 = vadd.f32 %v1163, %v1258
      %v1260 = vpop.f32.mrf.mxu0
      %1261 = vmatprep.mubr.bf16.mxu0 0
      %1262 = vmatmul.mubr.bf16.gmra.mxu0 %v1197
      %v1263 = vpop.f32.mrf.mxu0
      %v1264 = vadd.f32 %v1163, %v1263
      %v1265 = vpop.f32.mrf.mxu0
      %v1266 = vpop.f32.mrf.mxu0
      %v1267 = vadd.f32 %v1163, %v1266
      %v1268 = vpop.f32.mrf.mxu0
      %1269 = vmatprep.mubr.bf16.mxu0 0
      %1270 = vmatmul.mubr.bf16.gmra.mxu0 %v1199
      %v1271 = vpop.f32.mrf.mxu0
      %v1272 = vadd.f32 %v1163, %v1271
      %v1273 = vpop.f32.mrf.mxu0
      %v1274 = vpop.f32.mrf.mxu0
      %v1275 = vadd.f32 %v1163, %v1274
      %v1276 = vpop.f32.mrf.mxu0
      %1277 = vmatprep.mubr.bf16.mxu0 0
      %1278 = vmatmul.mubr.bf16.gmra.mxu0 %v1201
      %v1279 = vpop.f32.mrf.mxu0
      %v1280 = vadd.f32 %v1163, %v1279
      %v1281 = vpop.f32.mrf.mxu0
      %v1282 = vpop.f32.mrf.mxu0
      %v1283 = vadd.f32 %v1163, %v1282
      %v1284 = vpop.f32.mrf.mxu0
      %1285 = vmatprep.mubr.bf16.mxu0 0
      %1286 = vmatmul.mubr.bf16.gmra.mxu0 %v1203
      %v1287 = vpop.f32.mrf.mxu0
      %v1288 = vadd.f32 %v1163, %v1287
      %v1289 = vpop.f32.mrf.mxu0
      %v1290 = vpop.f32.mrf.mxu0
      %v1291 = vadd.f32 %v1163, %v1290
      %v1292 = vpop.f32.mrf.mxu0
      %1293 = vmatprep.mubr.bf16.mxu0 0
      %1294 = vmatmul.mubr.bf16.gmra.mxu0 %v1205
      %v1295 = vpop.f32.mrf.mxu0
      %v1296 = vadd.f32 %v1163, %v1295
      %v1297 = vpop.f32.mrf.mxu0
      %v1298 = vpop.f32.mrf.mxu0
      %v1299 = vadd.f32 %v1163, %v1298
      %v1300 = vpop.f32.mrf.mxu0
      %1301 = vmatprep.mubr.bf16.mxu0 0
      %1302 = vmatmul.mubr.bf16.gmra.mxu0 %v1207
      %v1303 = vpop.f32.mrf.mxu0
      %v1304 = vadd.f32 %v1163, %v1303
      %v1305 = vpop.f32.mrf.mxu0
      %v1306 = vpop.f32.mrf.mxu0
      %v1307 = vadd.f32 %v1163, %v1306
      %v1308 = vpop.f32.mrf.mxu0
      %1309 = vdwg.mxu0
      %1310 = vst [vmem:[%s408] sm:$0xff] %v1248
      %1311 = vst [vmem:[%s408 + $0x8] sm:$0xff] %v1251
      %1312 = vst [vmem:[%s408 + $0x10] sm:$0xff] %v1256
      %1313 = vst [vmem:[%s408 + $0x18] sm:$0xff] %v1259
      %1314 = vst [vmem:[%s408 + $0x20] sm:$0xff] %v1264
      %1315 = vst [vmem:[%s408 + $0x28] sm:$0xff] %v1267
      %1316 = vst [vmem:[%s408 + $0x30] sm:$0xff] %v1272
      %1317 = vst [vmem:[%s408 + $0x38] sm:$0xff] %v1275
      %1318 = vst [vmem:[%s408 + $0x40] sm:$0xff] %v1280
      %1319 = vst [vmem:[%s408 + $0x48] sm:$0xff] %v1283
      %1320 = vst [vmem:[%s408 + $0x50] sm:$0xff] %v1288
      %1321 = vst [vmem:[%s408 + $0x58] sm:$0xff] %v1291
      %1322 = vst [vmem:[%s408 + $0x60] sm:$0xff] %v1296
      %1323 = vst [vmem:[%s408 + $0x68] sm:$0xff] %v1299
      %1324 = vst [vmem:[%s408 + $0x70] sm:$0xff] %v1304
      %1325 = vst [vmem:[%s408 + $0x78] sm:$0xff] %v1307
      %s1326 = smul.u32 16, %s22
      %p1327 = scmp.lt.s32.totalorder %s21, 1
      %s1328 = scalar_select %p1327, %s21, 1
      %p1329 = scmp.lt.s32.totalorder %s1326, 31
      %s1330 = scalar_select %p1329, %s1326, 31
      %p1331 = scmp.lt.s32.totalorder %s23, 0
      %s1332 = scalar_select %p1331, %s23, 0
      %s1333 = sadd.s32 %s1332, %s1330
      %s1334 = smul.addr %s1328, 32
      %s1335 = sadd.s32 %s1333, %s1334
      %s1336 = smul.addr %s1335, 8
      %s1337 = scalar_lea.vmem %s5, %s1336
      // Predicated region
      $region41: #{keyvalue_pallas.1} parent=39 // pred_check
        %p1338 = pneg %p193
      $region42: #{keyvalue_pallas.1} parent=39 // pred_check_branch
        %1340 = sbr.rel (%p1338) target = $region44
      $region43: #{keyvalue_pallas.1} parent=39 // pred_region
        %s1341 = smul.u32 16, %s22
      $region44: #{keyvalue_pallas.1} parent=39 // pred_fallthru
        _
    $region40: #{keyvalue_pallas.1} parent=5 // pred_fallthru
      _
    %p1342 = scmp.le.s32.totalorder 2, %s11
    // Predicated region
    $region45: #{keyvalue_pallas.1} parent=5 // pred_check
      %p1343 = pneg %p1342
    $region46: #{keyvalue_pallas.1} parent=5 // pred_check_branch
      %1345 = sbr.rel (%p1343) target = $region48
    $region47: #{keyvalue_pallas.1} parent=5 // pred_region
      %s1346 = ssub.s32 %s11, 2
      // Predicated region
      $region49: #{keyvalue_pallas.1} parent=47 // pred_check
        %p1347 = pneg %p199
      $region50: #{keyvalue_pallas.1} parent=47 // pred_check_branch
        %1349 = sbr.rel (%p1347) target = $region52
      $region51: #{keyvalue_pallas.1} parent=47 // pred_region
        %s1350 = smul.u32 16, %s25
        %p1351 = scmp.lt.s32.totalorder %s24, 1
        %s1352 = scalar_select %p1351, %s24, 1
        %p1353 = scmp.lt.s32.totalorder %s1350, 31
        %s1354 = scalar_select %p1353, %s1350, 31
        %p1355 = scmp.lt.s32.totalorder %s26, 0
        %s1356 = scalar_select %p1355, %s26, 0
        %s1357 = sadd.s32 %s1356, %s1354
        %s1358 = smul.addr %s1352, 32
        %s1359 = sadd.s32 %s1357, %s1358
        %s1360 = smul.addr %s1359, 8
        %s1361 = scalar_lea.vmem %s5, %s1360
      $region52: #{keyvalue_pallas.1} parent=47 // pred_fallthru
        _
    $region48: #{keyvalue_pallas.1} parent=5 // pred_fallthru
      _
  $region6: #{keyvalue_pallas.1} parent=0 // loop_footer
    %s15 = sadd.s32 1, %s11
  $region7: #{keyvalue_pallas.1} parent=0 // loop_footer_branch
    %10 = sbr.rel target = $region3
  $region8: #{keyvalue_pallas.1} parent=0 // loop_exit
    _

</llo_original>
